<compile_context>
chip_gen: v6e
topology: v6e:2x2x1
jax: 0.10.0
libtpu: 0.0.40
codegen_flags: <defaults>
</compile_context>

<pallas_src>
import jax
import jax.numpy as jnp
from jax.experimental import pallas as pl
from jax.experimental.pallas import tpu as pltpu

BN_EPS = 1e-5
LANE = 128


def _round_up(n, m=LANE):
    return ((n + m - 1) // m) * m


def dqn_kernel(x_ref,
               w1_ref, b1_ref, g1_ref, be1_ref,
               w2_ref, b2_ref, g2_ref, be2_ref,
               w3_ref, b3_ref,
               out_ref):
    inv_b = 1.0 / x_ref.shape[0]  # static python scalar

    def linear_relu_bn(h_bf16, w_ref, b_ref, g_ref, be_ref):
        # Linear (MXU: bf16 inputs, f32 accumulation) + bias + ReLU in f32.
        h = jnp.dot(h_bf16, w_ref[...], preferred_element_type=jnp.float32) + b_ref[...]
        h = jnp.maximum(h, 0.0)
        # Training-mode BatchNorm1d, fused two-moment form:
        # the two reductions have no serial dependency, and normalization is a single
        # scale/shift elementwise pass.
        mean = jnp.sum(h, axis=0, keepdims=True) * inv_b
        ex2 = jnp.sum(h * h, axis=0, keepdims=True) * inv_b
        var = jnp.maximum(ex2 - mean * mean, 0.0)            # biased batch variance
        scale = g_ref[...] * jax.lax.rsqrt(var + BN_EPS)     # EUP rsqrt
        shift = be_ref[...] - scale * mean
        return h * scale + shift

    h = linear_relu_bn(x_ref[...], w1_ref, b1_ref, g1_ref, be1_ref)
    h = linear_relu_bn(h.astype(jnp.bfloat16), w2_ref, b2_ref, g2_ref, be2_ref)
    out = jnp.dot(h.astype(jnp.bfloat16), w3_ref[...],
                  preferred_element_type=jnp.float32) + b3_ref[...]
    out_ref[...] = out.astype(out_ref.dtype)  # lane-dense (128-wide) unmasked store


def dqn_forward(x, kparams, output_dim):
    """x: [B, input_dim] f32; kparams: kernel-layout params from prepare_kernel_params."""
    B, in_dim = x.shape
    in_pad = kparams["w1"].shape[0]
    h1 = kparams["w1"].shape[1]
    h2 = kparams["w2"].shape[1]
    out_pad = kparams["w3"].shape[1]

    # Zero-pad features to a lane-dense width; bf16 for the MXU (w1 has matching zero rows).
    if in_pad != in_dim:
        x = jnp.pad(x, ((0, 0), (0, in_pad - in_dim)))
    x = x.astype(jnp.bfloat16)

    args = (x,
            kparams["w1"], kparams["b1"], kparams["g1"], kparams["be1"],
            kparams["w2"], kparams["b2"], kparams["g2"], kparams["be2"],
            kparams["w3"], kparams["b3"])

    vmem = pl.BlockSpec(memory_space=pltpu.MemorySpace.VMEM)
    flops = 2 * B * (in_pad * h1 + h1 * h2 + h2 * out_pad)
    bytes_accessed = sum(int(a.size) * a.dtype.itemsize for a in args) + B * out_pad * 4
    cost = pl.CostEstimate(flops=flops,
                           transcendentals=h1 + h2,       # one rsqrt per BN feature
                           bytes_accessed=bytes_accessed)

    out_padded = pl.pallas_call(
        dqn_kernel,
        out_shape=jax.ShapeDtypeStruct((B, out_pad), jnp.float32),
        in_specs=[vmem] * len(args),
        out_specs=vmem,
        cost_estimate=cost,
    )(*args)
    # Slice the zero-padded lanes back off.
    return out_padded[:, :output_dim]


def init_params(key, input_dim, output_dim, hidden_sizes=(256, 256)):
    """PyTorch nn.Linear-style uniform init; weights stored as [in, out] (x @ W + b)."""
    h1, h2 = hidden_sizes
    keys = jax.random.split(key, 6)

    def linear(kw, kb, fan_in, fan_out):
        bound = 1.0 / jnp.sqrt(fan_in)
        w = jax.random.uniform(kw, (fan_in, fan_out), jnp.float32, -bound, bound)
        b = jax.random.uniform(kb, (1, fan_out), jnp.float32, -bound, bound)
        return w, b

    w1, b1 = linear(keys[0], keys[1], input_dim, h1)
    w2, b2 = linear(keys[2], keys[3], h1, h2)
    w3, b3 = linear(keys[4], keys[5], h2, output_dim)
    return {
        "w1": w1, "b1": b1, "g1": jnp.ones((1, h1), jnp.float32), "be1": jnp.zeros((1, h1), jnp.float32),
        "w2": w2, "b2": b2, "g2": jnp.ones((1, h2), jnp.float32), "be2": jnp.zeros((1, h2), jnp.float32),
        "w3": w3, "b3": b3,
    }


def prepare_kernel_params(p):
    """Kernel layout: bf16 weights; w1 input rows and w3/b3 output cols zero-padded to 128 lanes."""
    in_dim, _ = p["w1"].shape
    _, out_dim = p["w3"].shape
    in_pad = _round_up(in_dim)
    out_pad = _round_up(out_dim)

    w1 = jnp.pad(p["w1"], ((0, in_pad - in_dim), (0, 0))).astype(jnp.bfloat16)
    w2 = p["w2"].astype(jnp.bfloat16)
    w3 = jnp.pad(p["w3"], ((0, 0), (0, out_pad - out_dim))).astype(jnp.bfloat16)
    b3 = jnp.pad(p["b3"], ((0, 0), (0, out_pad - out_dim)))  # padded lanes exactly zero
    return {
        "w1": w1, "b1": p["b1"], "g1": p["g1"], "be1": p["be1"],
        "w2": w2, "b2": p["b2"], "g2": p["g2"], "be2": p["be2"],
        "w3": w3, "b3": b3,
    }


def dqn_reference(x, kp, output_dim):
    """Plain-JAX reference mirroring the kernel's numerics (bf16 matmul inputs, f32
    accumulation, fused training-mode BatchNorm).  Equals the PyTorch forward up to the
    intentional bf16 weight rounding."""
    def bn(h, g, be):
        mean = jnp.mean(h, axis=0, keepdims=True)
        var = jnp.maximum(jnp.mean(h * h, axis=0, keepdims=True) - mean * mean, 0.0)
        scale = g * jax.lax.rsqrt(var + BN_EPS)
        return h * scale + (be - scale * mean)

    in_pad = kp["w1"].shape[0]
    xb = jnp.pad(x, ((0, 0), (0, in_pad - x.shape[1]))).astype(jnp.bfloat16)
    h = jnp.maximum(jnp.dot(xb, kp["w1"], preferred_element_type=jnp.float32) + kp["b1"], 0.0)
    h = bn(h, kp["g1"], kp["be1"])
    h = jnp.maximum(jnp.dot(h.astype(jnp.bfloat16), kp["w2"],
                            preferred_element_type=jnp.float32) + kp["b2"], 0.0)
    h = bn(h, kp["g2"], kp["be2"])
    out = jnp.dot(h.astype(jnp.bfloat16), kp["w3"],
                  preferred_element_type=jnp.float32) + kp["b3"]
    return out[:, :output_dim]


if __name__ == "__main__":
    input_dim, output_dim = 32, 8
    batch = 8

    key = jax.random.PRNGKey(0)
    kx, kp = jax.random.split(key)
    x = jax.random.normal(kx, (batch, input_dim), jnp.float32)

    params = init_params(kp, input_dim, output_dim)
    kparams = prepare_kernel_params(params)

    out = dqn_forward(x, kparams, output_dim)
    out = jax.block_until_ready(out)

    ref = dqn_reference(x, kparams, output_dim)
    assert out.shape == (batch, output_dim)
    assert jnp.allclose(out, ref, atol=2e-3, rtol=2e-3), "mismatch vs reference"

    print("KERNEL_OK")
</pallas_src>

<mosaic_0001>
module attributes {stable_mosaic.version = 11 : i64} {
  func.func @dqn_kernel(%arg0: memref<8x128xbf16, #tpu.memory_space<vmem>>, %arg1: memref<128x256xbf16, #tpu.memory_space<vmem>>, %arg2: memref<1x256xf32, #tpu.memory_space<vmem>>, %arg3: memref<1x256xf32, #tpu.memory_space<vmem>>, %arg4: memref<1x256xf32, #tpu.memory_space<vmem>>, %arg5: memref<256x256xbf16, #tpu.memory_space<vmem>>, %arg6: memref<1x256xf32, #tpu.memory_space<vmem>>, %arg7: memref<1x256xf32, #tpu.memory_space<vmem>>, %arg8: memref<1x256xf32, #tpu.memory_space<vmem>>, %arg9: memref<256x128xbf16, #tpu.memory_space<vmem>>, %arg10: memref<1x128xf32, #tpu.memory_space<vmem>>, %arg11: memref<8x128xf32, #tpu.memory_space<vmem>>) attributes {dimension_semantics = [], scalar_prefetch = 0 : i64, scratch_operands = 0 : i64, tpu.core_type = #tpu.core_type<tc>} {
    %c0 = arith.constant 0 : index
    %c0_0 = arith.constant 0 : index
    %0 = vector.load %arg0[%c0, %c0_0] : memref<8x128xbf16, #tpu.memory_space<vmem>>, vector<8x128xbf16>
    %c0_1 = arith.constant 0 : index
    %c0_2 = arith.constant 0 : index
    %1 = vector.load %arg1[%c0_1, %c0_2] : memref<128x256xbf16, #tpu.memory_space<vmem>>, vector<128x256xbf16>
    %cst = arith.constant dense<0.000000e+00> : vector<8x256xf32>
    %2 = tpu.matmul %0, %1, %cst {dimension_numbers = #tpu.dot_dimension_numbers<[1], [0], [0], [1], [0, 0, 1, 1], [], []>} : vector<8x128xbf16>, vector<128x256xbf16>, vector<8x256xf32> -> vector<8x256xf32>
    %c0_3 = arith.constant 0 : index
    %c0_4 = arith.constant 0 : index
    %3 = vector.load %arg2[%c0_3, %c0_4] : memref<1x256xf32, #tpu.memory_space<vmem>>, vector<1x256xf32>
    %4 = vector.broadcast %3 : vector<1x256xf32> to vector<8x256xf32>
    %5 = arith.addf %2, %4 : vector<8x256xf32>
    %cst_5 = arith.constant 0.000000e+00 : f32
    %6 = vector.broadcast %cst_5 : f32 to vector<8x256xf32>
    %7 = arith.maximumf %5, %6 : vector<8x256xf32>
    %cst_6 = arith.constant dense<0.000000e+00> : vector<256xf32>
    %8 = vector.multi_reduction <add>, %7, %cst_6 [0] : vector<8x256xf32> to vector<256xf32>
    %9 = vector.shape_cast %8 : vector<256xf32> to vector<1x256xf32>
    %cst_7 = arith.constant 1.250000e-01 : f32
    %10 = vector.broadcast %cst_7 : f32 to vector<1x256xf32>
    %11 = arith.mulf %9, %10 : vector<1x256xf32>
    %12 = arith.mulf %7, %7 : vector<8x256xf32>
    %cst_8 = arith.constant dense<0.000000e+00> : vector<256xf32>
    %13 = vector.multi_reduction <add>, %12, %cst_8 [0] : vector<8x256xf32> to vector<256xf32>
    %14 = vector.shape_cast %13 : vector<256xf32> to vector<1x256xf32>
    %cst_9 = arith.constant 1.250000e-01 : f32
    %15 = vector.broadcast %cst_9 : f32 to vector<1x256xf32>
    %16 = arith.mulf %14, %15 : vector<1x256xf32>
    %17 = arith.mulf %11, %11 : vector<1x256xf32>
    %18 = arith.subf %16, %17 : vector<1x256xf32>
    %cst_10 = arith.constant 0.000000e+00 : f32
    %19 = vector.broadcast %cst_10 : f32 to vector<1x256xf32>
    %20 = arith.maximumf %18, %19 : vector<1x256xf32>
    %c0_11 = arith.constant 0 : index
    %c0_12 = arith.constant 0 : index
    %21 = vector.load %arg3[%c0_11, %c0_12] : memref<1x256xf32, #tpu.memory_space<vmem>>, vector<1x256xf32>
    %cst_13 = arith.constant 9.99999974E-6 : f32
    %22 = vector.broadcast %cst_13 : f32 to vector<1x256xf32>
    %23 = arith.addf %20, %22 : vector<1x256xf32>
    %24 = math.rsqrt %23 : vector<1x256xf32>
    %25 = arith.mulf %21, %24 : vector<1x256xf32>
    %c0_14 = arith.constant 0 : index
    %c0_15 = arith.constant 0 : index
    %26 = vector.load %arg4[%c0_14, %c0_15] : memref<1x256xf32, #tpu.memory_space<vmem>>, vector<1x256xf32>
    %27 = arith.mulf %25, %11 : vector<1x256xf32>
    %28 = arith.subf %26, %27 : vector<1x256xf32>
    %29 = vector.broadcast %25 : vector<1x256xf32> to vector<8x256xf32>
    %30 = arith.mulf %7, %29 : vector<8x256xf32>
    %31 = vector.broadcast %28 : vector<1x256xf32> to vector<8x256xf32>
    %32 = arith.addf %30, %31 : vector<8x256xf32>
    %33 = arith.truncf %32 : vector<8x256xf32> to vector<8x256xbf16>
    %c0_16 = arith.constant 0 : index
    %c0_17 = arith.constant 0 : index
    %34 = vector.load %arg5[%c0_16, %c0_17] : memref<256x256xbf16, #tpu.memory_space<vmem>>, vector<256x256xbf16>
    %cst_18 = arith.constant dense<0.000000e+00> : vector<8x256xf32>
    %35 = tpu.matmul %33, %34, %cst_18 {dimension_numbers = #tpu.dot_dimension_numbers<[1], [0], [0], [1], [0, 0, 1, 1], [], []>} : vector<8x256xbf16>, vector<256x256xbf16>, vector<8x256xf32> -> vector<8x256xf32>
    %c0_19 = arith.constant 0 : index
    %c0_20 = arith.constant 0 : index
    %36 = vector.load %arg6[%c0_19, %c0_20] : memref<1x256xf32, #tpu.memory_space<vmem>>, vector<1x256xf32>
    %37 = vector.broadcast %36 : vector<1x256xf32> to vector<8x256xf32>
    %38 = arith.addf %35, %37 : vector<8x256xf32>
    %cst_21 = arith.constant 0.000000e+00 : f32
    %39 = vector.broadcast %cst_21 : f32 to vector<8x256xf32>
    %40 = arith.maximumf %38, %39 : vector<8x256xf32>
    %cst_22 = arith.constant dense<0.000000e+00> : vector<256xf32>
    %41 = vector.multi_reduction <add>, %40, %cst_22 [0] : vector<8x256xf32> to vector<256xf32>
    %42 = vector.shape_cast %41 : vector<256xf32> to vector<1x256xf32>
    %cst_23 = arith.constant 1.250000e-01 : f32
    %43 = vector.broadcast %cst_23 : f32 to vector<1x256xf32>
    %44 = arith.mulf %42, %43 : vector<1x256xf32>
    %45 = arith.mulf %40, %40 : vector<8x256xf32>
    %cst_24 = arith.constant dense<0.000000e+00> : vector<256xf32>
    %46 = vector.multi_reduction <add>, %45, %cst_24 [0] : vector<8x256xf32> to vector<256xf32>
    %47 = vector.shape_cast %46 : vector<256xf32> to vector<1x256xf32>
    %cst_25 = arith.constant 1.250000e-01 : f32
    %48 = vector.broadcast %cst_25 : f32 to vector<1x256xf32>
    %49 = arith.mulf %47, %48 : vector<1x256xf32>
    %50 = arith.mulf %44, %44 : vector<1x256xf32>
    %51 = arith.subf %49, %50 : vector<1x256xf32>
    %cst_26 = arith.constant 0.000000e+00 : f32
    %52 = vector.broadcast %cst_26 : f32 to vector<1x256xf32>
    %53 = arith.maximumf %51, %52 : vector<1x256xf32>
    %c0_27 = arith.constant 0 : index
    %c0_28 = arith.constant 0 : index
    %54 = vector.load %arg7[%c0_27, %c0_28] : memref<1x256xf32, #tpu.memory_space<vmem>>, vector<1x256xf32>
    %cst_29 = arith.constant 9.99999974E-6 : f32
    %55 = vector.broadcast %cst_29 : f32 to vector<1x256xf32>
    %56 = arith.addf %53, %55 : vector<1x256xf32>
    %57 = math.rsqrt %56 : vector<1x256xf32>
    %58 = arith.mulf %54, %57 : vector<1x256xf32>
    %c0_30 = arith.constant 0 : index
    %c0_31 = arith.constant 0 : index
    %59 = vector.load %arg8[%c0_30, %c0_31] : memref<1x256xf32, #tpu.memory_space<vmem>>, vector<1x256xf32>
    %60 = arith.mulf %58, %44 : vector<1x256xf32>
    %61 = arith.subf %59, %60 : vector<1x256xf32>
    %62 = vector.broadcast %58 : vector<1x256xf32> to vector<8x256xf32>
    %63 = arith.mulf %40, %62 : vector<8x256xf32>
    %64 = vector.broadcast %61 : vector<1x256xf32> to vector<8x256xf32>
    %65 = arith.addf %63, %64 : vector<8x256xf32>
    %66 = arith.truncf %65 : vector<8x256xf32> to vector<8x256xbf16>
    %c0_32 = arith.constant 0 : index
    %c0_33 = arith.constant 0 : index
    %67 = vector.load %arg9[%c0_32, %c0_33] : memref<256x128xbf16, #tpu.memory_space<vmem>>, vector<256x128xbf16>
    %cst_34 = arith.constant dense<0.000000e+00> : vector<8x128xf32>
    %68 = tpu.matmul %66, %67, %cst_34 {dimension_numbers = #tpu.dot_dimension_numbers<[1], [0], [0], [1], [0, 0, 1, 1], [], []>} : vector<8x256xbf16>, vector<256x128xbf16>, vector<8x128xf32> -> vector<8x128xf32>
    %c0_35 = arith.constant 0 : index
    %c0_36 = arith.constant 0 : index
    %69 = vector.load %arg10[%c0_35, %c0_36] : memref<1x128xf32, #tpu.memory_space<vmem>>, vector<1x128xf32>
    %70 = vector.broadcast %69 : vector<1x128xf32> to vector<8x128xf32>
    %71 = arith.addf %68, %70 : vector<8x128xf32>
    %c0_37 = arith.constant 0 : index
    %c0_38 = arith.constant 0 : index
    %72 = vector.load %arg11[%c0_37, %c0_38] : memref<8x128xf32, #tpu.memory_space<vmem>>, vector<8x128xf32>
    tpu.vector_store %arg11[%c0_37, %c0_38], %71 {strides = array<i32>} : memref<8x128xf32, #tpu.memory_space<vmem>>, vector<8x128xf32>,
    return
  }
}

</mosaic_0001>

<llo_original>
// kernel: tpu_custom_call.1
$region0: #{tpu_custom_call.1}
  #allocation0 [shape = 'u32[]', space=smem, size = 0x4, offset = 0x4, fixed_abs, tag = 'smem constant byte address 0x4 - core index']
  #allocation1 [shape = 'u32[144,128]{1,0:T(1,128)}', space=vmem, size = 0x12000, scoped, tag = 'internal scratch']
  %s0 = inlined_call_operand.hbm [shape: bf16[8,128], index: 0, kind: input, shape index: {}]
  %s1 = inlined_call_operand.hbm [shape: bf16[128,256], index: 1, kind: input, shape index: {}]
  %s2 = inlined_call_operand.vmem [shape: f32[1,256], index: 2, kind: input, shape index: {}]
  %s3 = inlined_call_operand.vmem [shape: f32[1,256], index: 3, kind: input, shape index: {}]
  %s4 = inlined_call_operand.vmem [shape: f32[1,256], index: 4, kind: input, shape index: {}]
  %s5 = inlined_call_operand.hbm [shape: bf16[256,256], index: 5, kind: input, shape index: {}]
  %s6 = inlined_call_operand.vmem [shape: f32[1,256], index: 6, kind: input, shape index: {}]
  %s7 = inlined_call_operand.vmem [shape: f32[1,256], index: 7, kind: input, shape index: {}]
  %s8 = inlined_call_operand.vmem [shape: f32[1,256], index: 8, kind: input, shape index: {}]
  %s9 = inlined_call_operand.hbm [shape: bf16[256,128], index: 9, kind: input, shape index: {}]
  %s10 = inlined_call_operand.vmem [shape: f32[1,128], index: 10, kind: input, shape index: {}]
  %s11 = inlined_call_operand.hbm [shape: f32[8,128], index: 11, kind: output, shape index: {}]
  %s12 = sld [smem:[#allocation0]]
  $region70: #{tpu_custom_call.1} parent=0
    _
  %s14 = ssub.s32 1, %s12
  %s15 = scalar_select 0, %s14, %s12
  $region1: #{tpu_custom_call.1} parent=0
    #allocation2 [shape = 'u8[2048]{0}', space=vmem, size = 0x800, scoped, tag = 'input window, operand 0, single buffered']
    #allocation3 [shape = 's32[1]{0}', space=sflag, size = 0x4, scoped, tag = 'scoped memory for tpu_custom_call.1']
    #allocation4 [shape = 's32[1]{0}', space=sflag, size = 0x4, scoped, tag = 'scoped memory for tpu_custom_call.1']
    #allocation5 [shape = 'u8[65536]{0}', space=vmem, size = 0x10000, scoped, tag = 'input window, operand 1, single buffered']
    #allocation6 [shape = 's32[1]{0}', space=sflag, size = 0x4, scoped, tag = 'scoped memory for tpu_custom_call.1']
    #allocation7 [shape = 'u8[131072]{0}', space=vmem, size = 0x20000, scoped, tag = 'input window, operand 5, single buffered']
    #allocation8 [shape = 'u8[65536]{0}', space=vmem, size = 0x10000, scoped, tag = 'input window, operand 9, single buffered']
    #allocation9 [shape = 's32[1]{0}', space=sflag, size = 0x4, scoped, tag = 'scoped memory for tpu_custom_call.1']
    #allocation10 [shape = 'u8[4096]{0}', space=vmem, size = 0x1000, scoped, tag = 'output window, operand 0, single buffered']
    %16 = vsyncpa [#allocation3], 0
    %17 = vsyncpa [#allocation6], 0
    %18 = vsyncpa [#allocation9], 0
    %19 = vsyncpa [#allocation4], 0
    // Predicated region
    $region2: #{tpu_custom_call.1} parent=1 // pred_check
      _
    $region3: #{tpu_custom_call.1} parent=1 // pred_check_branch
      %21 = sbr.rel (0) target = $region5
    $region4: #{tpu_custom_call.1} parent=1 // pred_region
      %s23 = ssub.s32 64, 64
      %24 = vsyncadd [#allocation3], %s23
      %s26 = sshll.u32 [#allocation2], 4
      %s27 = int_to_ptr.vmem [resolvable:$true] %s26
      %29 = dma.hbm_to_vmem [thread:$0]  %s0, 64, %s27, [#allocation3]
    $region5: #{tpu_custom_call.1} parent=1 // pred_fallthru
      _
    // Predicated region
    $region6: #{tpu_custom_call.1} parent=1 // pred_check
      _
    $region7: #{tpu_custom_call.1} parent=1 // pred_check_branch
      %31 = sbr.rel (0) target = $region9
    $region8: #{tpu_custom_call.1} parent=1 // pred_region
      %s33 = ssub.s32 2048, 2048
      %34 = vsyncadd [#allocation6], %s33
      %s35 = sshll.u32 [#allocation5], 4
      %s36 = int_to_ptr.vmem [resolvable:$true] %s35
      %41 = dma.hbm_to_vmem [thread:$0]  %s1, 2048, %s36, [#allocation6], 128, 128, 8
    $region9: #{tpu_custom_call.1} parent=1 // pred_fallthru
      _
    // Predicated region
    $region10: #{tpu_custom_call.1} parent=1 // pred_check
      _
    $region11: #{tpu_custom_call.1} parent=1 // pred_check_branch
      %43 = sbr.rel (0) target = $region13
    $region12: #{tpu_custom_call.1} parent=1 // pred_region
      _
    $region13: #{tpu_custom_call.1} parent=1 // pred_fallthru
      _
    // Predicated region
    $region14: #{tpu_custom_call.1} parent=1 // pred_check
      _
    $region15: #{tpu_custom_call.1} parent=1 // pred_check_branch
      %45 = sbr.rel (0) target = $region17
    $region16: #{tpu_custom_call.1} parent=1 // pred_region
      _
    $region17: #{tpu_custom_call.1} parent=1 // pred_fallthru
      _
    // Predicated region
    $region18: #{tpu_custom_call.1} parent=1 // pred_check
      _
    $region19: #{tpu_custom_call.1} parent=1 // pred_check_branch
      %47 = sbr.rel (0) target = $region21
    $region20: #{tpu_custom_call.1} parent=1 // pred_region
      _
    $region21: #{tpu_custom_call.1} parent=1 // pred_fallthru
      _
    // Predicated region
    $region22: #{tpu_custom_call.1} parent=1 // pred_check
      _
    $region23: #{tpu_custom_call.1} parent=1 // pred_check_branch
      %49 = sbr.rel (0) target = $region25
    $region24: #{tpu_custom_call.1} parent=1 // pred_region
      %s51 = ssub.s32 4096, 4096
      %52 = vsyncadd [#allocation6], %s51
      %s53 = sshll.u32 [#allocation7], 4
      %s54 = int_to_ptr.vmem [resolvable:$true] %s53
      %59 = dma.hbm_to_vmem [thread:$0]  %s5, 4096, %s54, [#allocation6], 128, 128, 8
    $region25: #{tpu_custom_call.1} parent=1 // pred_fallthru
      _
    // Predicated region
    $region26: #{tpu_custom_call.1} parent=1 // pred_check
      _
    $region27: #{tpu_custom_call.1} parent=1 // pred_check_branch
      %61 = sbr.rel (0) target = $region29
    $region28: #{tpu_custom_call.1} parent=1 // pred_region
      _
    $region29: #{tpu_custom_call.1} parent=1 // pred_fallthru
      _
    // Predicated region
    $region30: #{tpu_custom_call.1} parent=1 // pred_check
      _
    $region31: #{tpu_custom_call.1} parent=1 // pred_check_branch
      %63 = sbr.rel (0) target = $region33
    $region32: #{tpu_custom_call.1} parent=1 // pred_region
      _
    $region33: #{tpu_custom_call.1} parent=1 // pred_fallthru
      _
    // Predicated region
    $region34: #{tpu_custom_call.1} parent=1 // pred_check
      _
    $region35: #{tpu_custom_call.1} parent=1 // pred_check_branch
      %65 = sbr.rel (0) target = $region37
    $region36: #{tpu_custom_call.1} parent=1 // pred_region
      _
    $region37: #{tpu_custom_call.1} parent=1 // pred_fallthru
      _
    // Predicated region
    $region38: #{tpu_custom_call.1} parent=1 // pred_check
      _
    $region39: #{tpu_custom_call.1} parent=1 // pred_check_branch
      %67 = sbr.rel (0) target = $region41
    $region40: #{tpu_custom_call.1} parent=1 // pred_region
      %s69 = ssub.s32 2048, 2048
      %70 = vsyncadd [#allocation9], %s69
      %s71 = sshll.u32 [#allocation8], 4
      %s72 = int_to_ptr.vmem [resolvable:$true] %s71
      %77 = dma.hbm_to_vmem [thread:$0]  %s9, 2048, %s72, [#allocation9], 64, 64, 4
    $region41: #{tpu_custom_call.1} parent=1 // pred_fallthru
      _
    // Predicated region
    $region42: #{tpu_custom_call.1} parent=1 // pred_check
      _
    $region43: #{tpu_custom_call.1} parent=1 // pred_check_branch
      %79 = sbr.rel (0) target = $region45
    $region44: #{tpu_custom_call.1} parent=1 // pred_region
      _
    $region45: #{tpu_custom_call.1} parent=1 // pred_fallthru
      _
    // Predicated region
    $region46: #{tpu_custom_call.1} parent=1 // pred_check
      _
    $region47: #{tpu_custom_call.1} parent=1 // pred_check_branch
      %81 = sbr.rel (0) target = $region49
    $region48: #{tpu_custom_call.1} parent=1 // pred_region
      %82 = dma.done [#allocation3], 64
    $region49: #{tpu_custom_call.1} parent=1 // pred_fallthru
      _
    // Predicated region
    $region50: #{tpu_custom_call.1} parent=1 // pred_check
      _
    $region51: #{tpu_custom_call.1} parent=1 // pred_check_branch
      %84 = sbr.rel (0) target = $region53
    $region52: #{tpu_custom_call.1} parent=1 // pred_region
      %85 = dma.done [#allocation6], 2048
    $region53: #{tpu_custom_call.1} parent=1 // pred_fallthru
      _
    // Predicated region
    $region54: #{tpu_custom_call.1} parent=1 // pred_check
      _
    $region55: #{tpu_custom_call.1} parent=1 // pred_check_branch
      %87 = sbr.rel (0) target = $region57
    $region56: #{tpu_custom_call.1} parent=1 // pred_region
      %88 = dma.done [#allocation6], 4096
    $region57: #{tpu_custom_call.1} parent=1 // pred_fallthru
      _
    // Predicated region
    $region58: #{tpu_custom_call.1} parent=1 // pred_check
      _
    $region59: #{tpu_custom_call.1} parent=1 // pred_check_branch
      %90 = sbr.rel (0) target = $region61
    $region60: #{tpu_custom_call.1} parent=1 // pred_region
      %91 = dma.done [#allocation9], 2048
    $region61: #{tpu_custom_call.1} parent=1 // pred_fallthru
      _
    %v93 = vld [vmem:[#allocation2] sm:$0xf]
    %v94 = vld [vmem:[#allocation5] sm:$0xff]
    %v95 = vld [vmem:[#allocation5 + $0x8] sm:$0xff]
    %v96 = vld [vmem:[#allocation5 + $0x10] sm:$0xff]
    %v97 = vld [vmem:[#allocation5 + $0x18] sm:$0xff]
    %v98 = vld [vmem:[#allocation5 + $0x20] sm:$0xff]
    %v99 = vld [vmem:[#allocation5 + $0x28] sm:$0xff]
    %v100 = vld [vmem:[#allocation5 + $0x30] sm:$0xff]
    %v101 = vld [vmem:[#allocation5 + $0x38] sm:$0xff]
    %v102 = vld [vmem:[#allocation5 + $0x40] sm:$0xff]
    %v103 = vld [vmem:[#allocation5 + $0x48] sm:$0xff]
    %v104 = vld [vmem:[#allocation5 + $0x50] sm:$0xff]
    %v105 = vld [vmem:[#allocation5 + $0x58] sm:$0xff]
    %v106 = vld [vmem:[#allocation5 + $0x60] sm:$0xff]
    %v107 = vld [vmem:[#allocation5 + $0x68] sm:$0xff]
    %v108 = vld [vmem:[#allocation5 + $0x70] sm:$0xff]
    %v109 = vld [vmem:[#allocation5 + $0x78] sm:$0xff]
    %v110 = vld [vmem:[%s2] sm:$0x3]
    %v112 = vlaneseq
    %v113 = vshrl.u32 %v112, 7
    %v114 = vsub.s32 0, %v113
    %v115 = vrot.slane %v110, %v114
    %v116 = vlaneseq
    %v117 = vshrl.u32 %v116, 7
    %v118 = vsub.s32 1, %v117
    %v119 = vrot.slane %v110, %v118
    %v138 = vunpack.c.l.b16 %v94
    %v139 = vunpack.c.h.b16 %v94
    %v140 = vunpack.c.l.b16 %v95
    %v141 = vunpack.c.h.b16 %v95
    %v142 = vunpack.c.l.b16 %v96
    %v143 = vunpack.c.h.b16 %v96
    %v144 = vunpack.c.l.b16 %v97
    %v145 = vunpack.c.h.b16 %v97
    %v146 = vunpack.c.l.b16 %v98
    %v147 = vunpack.c.h.b16 %v98
    %v148 = vunpack.c.l.b16 %v99
    %v149 = vunpack.c.h.b16 %v99
    %v150 = vunpack.c.l.b16 %v100
    %v151 = vunpack.c.h.b16 %v100
    %v152 = vunpack.c.l.b16 %v101
    %v153 = vunpack.c.h.b16 %v101
    %v154 = vunpack.c.l.b16 %v102
    %v155 = vunpack.c.h.b16 %v102
    %v156 = vunpack.c.l.b16 %v103
    %v157 = vunpack.c.h.b16 %v103
    %v158 = vunpack.c.l.b16 %v104
    %v159 = vunpack.c.h.b16 %v104
    %v160 = vunpack.c.l.b16 %v105
    %v161 = vunpack.c.h.b16 %v105
    %v162 = vunpack.c.l.b16 %v106
    %v163 = vunpack.c.h.b16 %v106
    %v164 = vunpack.c.l.b16 %v107
    %v165 = vunpack.c.h.b16 %v107
    %v166 = vunpack.c.l.b16 %v108
    %v167 = vunpack.c.h.b16 %v108
    %v168 = vunpack.c.l.b16 %v109
    %v169 = vunpack.c.h.b16 %v109
    %v170 = vpack.c.b16 %v140, %v138
    %v171 = vpack.c.b16 %v141, %v139
    %v172 = vpack.c.b16 %v144, %v142
    %v173 = vpack.c.b16 %v145, %v143
    %v174 = vpack.c.b16 %v148, %v146
    %v175 = vpack.c.b16 %v149, %v147
    %v176 = vpack.c.b16 %v152, %v150
    %v177 = vpack.c.b16 %v153, %v151
    %v178 = vpack.c.b16 %v156, %v154
    %v179 = vpack.c.b16 %v157, %v155
    %v180 = vpack.c.b16 %v160, %v158
    %v181 = vpack.c.b16 %v161, %v159
    %v182 = vpack.c.b16 %v164, %v162
    %v183 = vpack.c.b16 %v165, %v163
    %v184 = vpack.c.b16 %v168, %v166
    %v185 = vpack.c.b16 %v169, %v167
    %202 = vmatprep.subr.bf16.mxu0 %v185
    %203 = vmatpush1.bf16.msra.mxu0 %v184
    %204 = vmatprep.subr.bf16.mxu0 %v183
    %205 = vmatpush1.bf16.msra.mxu0 %v182
    %206 = vmatprep.subr.bf16.mxu0 %v181
    %207 = vmatpush1.bf16.msra.mxu0 %v180
    %208 = vmatprep.subr.bf16.mxu0 %v179
    %209 = vmatpush1.bf16.msra.mxu0 %v178
    %210 = vmatprep.subr.bf16.mxu0 %v177
    %211 = vmatpush1.bf16.msra.mxu0 %v176
    %212 = vmatprep.subr.bf16.mxu0 %v175
    %213 = vmatpush1.bf16.msra.mxu0 %v174
    %214 = vmatprep.subr.bf16.mxu0 %v173
    %215 = vmatpush1.bf16.msra.mxu0 %v172
    %216 = vmatprep.subr.bf16.mxu0 %v171
    %217 = vmatpush1.bf16.msra.mxu0 %v170
    %218 = vmatprep.subr.bf16.mxu0 0
    %219 = vmatpush2.bf16.msra.mxu0 0
    %220 = vmatprep.subr.bf16.mxu0 0
    %221 = vmatpush2.bf16.msra.mxu0 0
    %222 = vmatprep.subr.bf16.mxu0 0
    %223 = vmatpush2.bf16.msra.mxu0 0
    %224 = vmatprep.subr.bf16.mxu0 0
    %225 = vmatpush2.bf16.msra.mxu0 0
    %226 = vmatprep.subr.bf16.mxu0 0
    %227 = vmatpush2.bf16.msra.mxu0 0
    %228 = vmatprep.subr.bf16.mxu0 0
    %229 = vmatpush2.bf16.msra.mxu0 0
    %230 = vmatprep.subr.bf16.mxu0 0
    %231 = vmatpush2.bf16.msra.mxu0 0
    %232 = vmatprep.subr.bf16.mxu0 0
    %233 = vmatpush2.bf16.msra.mxu0 0
    %234 = vmatprep.mubr.bf16.mxu0 0
    %235 = vmatmul.mubr.bf16.gmra.mxu0 %v93
    %v236 = vpop.f32.mrf.mxu0
    %v237 = vadd.f32 %v115, %v236
    %v238 = vpop.f32.mrf.mxu0
    %v239 = vadd.f32 %v119, %v238
    %v240 = vpop.f32.mrf.mxu0
    %v241 = vpop.f32.mrf.mxu0
    %242 = vdwg.mxu0
    %v243 = vmax.f32 %v237, 0.0
    %v244 = vmax.f32 %v239, 0.0
    %v245 = vrot.slane %v243, 4
    %v246 = vadd.f32 %v243, %v245
    %v247 = vrot.slane %v246, 2
    %v248 = vadd.f32 %v246, %v247
    %v249 = vrot.slane %v248, 1
    %v250 = vadd.f32 %v248, %v249
    %v251 = vrot.slane %v244, 4
    %v252 = vadd.f32 %v244, %v251
    %v253 = vrot.slane %v252, 2
    %v254 = vadd.f32 %v252, %v253
    %v255 = vrot.slane %v254, 1
    %v256 = vadd.f32 %v254, %v255
    %v257 = vmul.f32 %v250, 0.125
    %v258 = vmul.f32 %v256, 0.125
    %v259 = vmul.f32 %v243, %v243
    %v260 = vmul.f32 %v244, %v244
    %v261 = vrot.slane %v259, 4
    %v262 = vadd.f32 %v259, %v261
    %v263 = vrot.slane %v262, 2
    %v264 = vadd.f32 %v262, %v263
    %v265 = vrot.slane %v264, 1
    %v266 = vadd.f32 %v264, %v265
    %v267 = vrot.slane %v260, 4
    %v268 = vadd.f32 %v260, %v267
    %v269 = vrot.slane %v268, 2
    %v270 = vadd.f32 %v268, %v269
    %v271 = vrot.slane %v270, 1
    %v272 = vadd.f32 %v270, %v271
    %v273 = vmul.f32 %v266, 0.125
    %v274 = vmul.f32 %v272, 0.125
    %v275 = vmul.f32 %v257, %v257
    %v276 = vmul.f32 %v258, %v258
    %v277 = vsub.f32 %v273, %v275
    %v278 = vsub.f32 %v274, %v276
    %v279 = vmax.f32 %v277, 0.0
    %v280 = vmax.f32 %v278, 0.0
    %v281 = vld [vmem:[%s3] sm:$0x3]
    %v282 = vadd.f32 %v279, 1e-05
    %v283 = vadd.f32 %v280, 1e-05
    %v284 = vrsqrt.pop %v282
    %v285 = vrsqrt.pop %v283
    %v288 = vcombine.low %v284, %v285
    %v290 = vunpack.c.l.s4 1966171168
    %v291 = vunpack.c.0.s8 %v290
    %v292 = vlaneseq
    %v293 = vshrl.u32 %v292, 7
    %v294 = vsub.s32 %v291, %v293
    %v295 = vrot.slane %v288, %v294
    %v297 = vunpack.c.l.s4 1966171168
    %v298 = vunpack.c.0.s8 %v297
    %v299 = vlaneseq
    %v300 = vshrl.u32 %v299, 7
    %v301 = vsub.s32 %v298, %v300
    %v302 = vrot.slane %v295, %v301
    %v304 = vmul.f32 %v281, %v302
    %v305 = vld [vmem:[%s4] sm:$0x3]
    %v308 = vcombine.low %v257, %v258
    %v310 = vunpack.c.l.s4 1966171168
    %v311 = vunpack.c.0.s8 %v310
    %v312 = vlaneseq
    %v313 = vshrl.u32 %v312, 7
    %v314 = vsub.s32 %v311, %v313
    %v315 = vrot.slane %v308, %v314
    %v317 = vunpack.c.l.s4 1966171168
    %v318 = vunpack.c.0.s8 %v317
    %v319 = vlaneseq
    %v320 = vshrl.u32 %v319, 7
    %v321 = vsub.s32 %v318, %v320
    %v322 = vrot.slane %v315, %v321
    %v324 = vmul.f32 %v304, %v322
    %v325 = vsub.f32 %v305, %v324
    %v327 = vlaneseq
    %v328 = vshrl.u32 %v327, 7
    %v329 = vsub.s32 0, %v328
    %v330 = vrot.slane %v304, %v329
    %v331 = vlaneseq
    %v332 = vshrl.u32 %v331, 7
    %v333 = vsub.s32 1, %v332
    %v334 = vrot.slane %v304, %v333
    %v337 = vmul.f32 %v243, %v330
    %v338 = vmul.f32 %v244, %v334
    %v340 = vlaneseq
    %v341 = vshrl.u32 %v340, 7
    %v342 = vsub.s32 0, %v341
    %v343 = vrot.slane %v325, %v342
    %v344 = vlaneseq
    %v345 = vshrl.u32 %v344, 7
    %v346 = vsub.s32 1, %v345
    %v347 = vrot.slane %v325, %v346
    %v350 = vadd.f32 %v337, %v343
    %v351 = vadd.f32 %v338, %v347
    %v352 = vpack.c.bf16 %v350, %v350
    %v353 = vpack.c.bf16 %v351, %v351
    %v354 = vld [vmem:[#allocation7] sm:$0xff]
    %v355 = vld [vmem:[#allocation7 + $0x8] sm:$0xff]
    %v356 = vld [vmem:[#allocation7 + $0x10] sm:$0xff]
    %v357 = vld [vmem:[#allocation7 + $0x18] sm:$0xff]
    %v358 = vld [vmem:[#allocation7 + $0x20] sm:$0xff]
    %v359 = vld [vmem:[#allocation7 + $0x28] sm:$0xff]
    %v360 = vld [vmem:[#allocation7 + $0x30] sm:$0xff]
    %v361 = vld [vmem:[#allocation7 + $0x38] sm:$0xff]
    %v362 = vld [vmem:[#allocation7 + $0x40] sm:$0xff]
    %v363 = vld [vmem:[#allocation7 + $0x48] sm:$0xff]
    %v364 = vld [vmem:[#allocation7 + $0x50] sm:$0xff]
    %v365 = vld [vmem:[#allocation7 + $0x58] sm:$0xff]
    %v366 = vld [vmem:[#allocation7 + $0x60] sm:$0xff]
    %v367 = vld [vmem:[#allocation7 + $0x68] sm:$0xff]
    %v368 = vld [vmem:[#allocation7 + $0x70] sm:$0xff]
    %v369 = vld [vmem:[#allocation7 + $0x78] sm:$0xff]
    %v370 = vld [vmem:[#allocation7 + $0x80] sm:$0xff]
    %v371 = vld [vmem:[#allocation7 + $0x88] sm:$0xff]
    %v372 = vld [vmem:[#allocation7 + $0x90] sm:$0xff]
    %v373 = vld [vmem:[#allocation7 + $0x98] sm:$0xff]
    %v374 = vld [vmem:[#allocation7 + $0xa0] sm:$0xff]
    %v375 = vld [vmem:[#allocation7 + $0xa8] sm:$0xff]
    %v376 = vld [vmem:[#allocation7 + $0xb0] sm:$0xff]
    %v377 = vld [vmem:[#allocation7 + $0xb8] sm:$0xff]
    %v378 = vld [vmem:[#allocation7 + $0xc0] sm:$0xff]
    %v379 = vld [vmem:[#allocation7 + $0xc8] sm:$0xff]
    %v380 = vld [vmem:[#allocation7 + $0xd0] sm:$0xff]
    %v381 = vld [vmem:[#allocation7 + $0xd8] sm:$0xff]
    %v382 = vld [vmem:[#allocation7 + $0xe0] sm:$0xff]
    %v383 = vld [vmem:[#allocation7 + $0xe8] sm:$0xff]
    %v384 = vld [vmem:[#allocation7 + $0xf0] sm:$0xff]
    %v385 = vld [vmem:[#allocation7 + $0xf8] sm:$0xff]
    %v386 = vld [vmem:[%s6] sm:$0x3]
    %v388 = vlaneseq
    %v389 = vshrl.u32 %v388, 7
    %v390 = vsub.s32 0, %v389
    %v391 = vrot.slane %v386, %v390
    %v392 = vlaneseq
    %v393 = vshrl.u32 %v392, 7
    %v394 = vsub.s32 1, %v393
    %v395 = vrot.slane %v386, %v394
    %v430 = vunpack.c.l.b16 %v354
    %v431 = vunpack.c.h.b16 %v354
    %v432 = vunpack.c.l.b16 %v355
    %v433 = vunpack.c.h.b16 %v355
    %v434 = vunpack.c.l.b16 %v356
    %v435 = vunpack.c.h.b16 %v356
    %v436 = vunpack.c.l.b16 %v357
    %v437 = vunpack.c.h.b16 %v357
    %v438 = vunpack.c.l.b16 %v358
    %v439 = vunpack.c.h.b16 %v358
    %v440 = vunpack.c.l.b16 %v359
    %v441 = vunpack.c.h.b16 %v359
    %v442 = vunpack.c.l.b16 %v360
    %v443 = vunpack.c.h.b16 %v360
    %v444 = vunpack.c.l.b16 %v361
    %v445 = vunpack.c.h.b16 %v361
    %v446 = vunpack.c.l.b16 %v362
    %v447 = vunpack.c.h.b16 %v362
    %v448 = vunpack.c.l.b16 %v363
    %v449 = vunpack.c.h.b16 %v363
    %v450 = vunpack.c.l.b16 %v364
    %v451 = vunpack.c.h.b16 %v364
    %v452 = vunpack.c.l.b16 %v365
    %v453 = vunpack.c.h.b16 %v365
    %v454 = vunpack.c.l.b16 %v366
    %v455 = vunpack.c.h.b16 %v366
    %v456 = vunpack.c.l.b16 %v367
    %v457 = vunpack.c.h.b16 %v367
    %v458 = vunpack.c.l.b16 %v368
    %v459 = vunpack.c.h.b16 %v368
    %v460 = vunpack.c.l.b16 %v369
    %v461 = vunpack.c.h.b16 %v369
    %v462 = vunpack.c.l.b16 %v370
    %v463 = vunpack.c.h.b16 %v370
    %v464 = vunpack.c.l.b16 %v371
    %v465 = vunpack.c.h.b16 %v371
    %v466 = vunpack.c.l.b16 %v372
    %v467 = vunpack.c.h.b16 %v372
    %v468 = vunpack.c.l.b16 %v373
    %v469 = vunpack.c.h.b16 %v373
    %v470 = vunpack.c.l.b16 %v374
    %v471 = vunpack.c.h.b16 %v374
    %v472 = vunpack.c.l.b16 %v375
    %v473 = vunpack.c.h.b16 %v375
    %v474 = vunpack.c.l.b16 %v376
    %v475 = vunpack.c.h.b16 %v376
    %v476 = vunpack.c.l.b16 %v377
    %v477 = vunpack.c.h.b16 %v377
    %v478 = vunpack.c.l.b16 %v378
    %v479 = vunpack.c.h.b16 %v378
    %v480 = vunpack.c.l.b16 %v379
    %v481 = vunpack.c.h.b16 %v379
    %v482 = vunpack.c.l.b16 %v380
    %v483 = vunpack.c.h.b16 %v380
    %v484 = vunpack.c.l.b16 %v381
    %v485 = vunpack.c.h.b16 %v381
    %v486 = vunpack.c.l.b16 %v382
    %v487 = vunpack.c.h.b16 %v382
    %v488 = vunpack.c.l.b16 %v383
    %v489 = vunpack.c.h.b16 %v383
    %v490 = vunpack.c.l.b16 %v384
    %v491 = vunpack.c.h.b16 %v384
    %v492 = vunpack.c.l.b16 %v385
    %v493 = vunpack.c.h.b16 %v385
    %v494 = vpack.c.b16 %v432, %v430
    %v495 = vpack.c.b16 %v433, %v431
    %v496 = vpack.c.b16 %v436, %v434
    %v497 = vpack.c.b16 %v437, %v435
    %v498 = vpack.c.b16 %v440, %v438
    %v499 = vpack.c.b16 %v441, %v439
    %v500 = vpack.c.b16 %v444, %v442
    %v501 = vpack.c.b16 %v445, %v443
    %v502 = vpack.c.b16 %v448, %v446
    %v503 = vpack.c.b16 %v449, %v447
    %v504 = vpack.c.b16 %v452, %v450
    %v505 = vpack.c.b16 %v453, %v451
    %v506 = vpack.c.b16 %v456, %v454
    %v507 = vpack.c.b16 %v457, %v455
    %v508 = vpack.c.b16 %v460, %v458
    %v509 = vpack.c.b16 %v461, %v459
    %v510 = vpack.c.b16 %v464, %v462
    %v511 = vpack.c.b16 %v465, %v463
    %v512 = vpack.c.b16 %v468, %v466
    %v513 = vpack.c.b16 %v469, %v467
    %v514 = vpack.c.b16 %v472, %v470
    %v515 = vpack.c.b16 %v473, %v471
    %v516 = vpack.c.b16 %v476, %v474
    %v517 = vpack.c.b16 %v477, %v475
    %v518 = vpack.c.b16 %v480, %v478
    %v519 = vpack.c.b16 %v481, %v479
    %v520 = vpack.c.b16 %v484, %v482
    %v521 = vpack.c.b16 %v485, %v483
    %v522 = vpack.c.b16 %v488, %v486
    %v523 = vpack.c.b16 %v489, %v487
    %v524 = vpack.c.b16 %v492, %v490
    %v525 = vpack.c.b16 %v493, %v491
    %558 = vmatprep.subr.bf16.mxu0 %v509
    %559 = vmatpush1.bf16.msra.mxu0 %v508
    %560 = vmatprep.subr.bf16.mxu0 %v507
    %561 = vmatpush1.bf16.msra.mxu0 %v506
    %562 = vmatprep.subr.bf16.mxu0 %v505
    %563 = vmatpush1.bf16.msra.mxu0 %v504
    %564 = vmatprep.subr.bf16.mxu0 %v503
    %565 = vmatpush1.bf16.msra.mxu0 %v502
    %566 = vmatprep.subr.bf16.mxu0 %v501
    %567 = vmatpush1.bf16.msra.mxu0 %v500
    %568 = vmatprep.subr.bf16.mxu0 %v499
    %569 = vmatpush1.bf16.msra.mxu0 %v498
    %570 = vmatprep.subr.bf16.mxu0 %v497
    %571 = vmatpush1.bf16.msra.mxu0 %v496
    %572 = vmatprep.subr.bf16.mxu0 %v495
    %573 = vmatpush1.bf16.msra.mxu0 %v494
    %574 = vmatprep.subr.bf16.mxu0 %v525
    %575 = vmatpush2.bf16.msra.mxu0 %v524
    %576 = vmatprep.subr.bf16.mxu0 %v523
    %577 = vmatpush2.bf16.msra.mxu0 %v522
    %578 = vmatprep.subr.bf16.mxu0 %v521
    %579 = vmatpush2.bf16.msra.mxu0 %v520
    %580 = vmatprep.subr.bf16.mxu0 %v519
    %581 = vmatpush2.bf16.msra.mxu0 %v518
    %582 = vmatprep.subr.bf16.mxu0 %v517
    %583 = vmatpush2.bf16.msra.mxu0 %v516
    %584 = vmatprep.subr.bf16.mxu0 %v515
    %585 = vmatpush2.bf16.msra.mxu0 %v514
    %586 = vmatprep.subr.bf16.mxu0 %v513
    %587 = vmatpush2.bf16.msra.mxu0 %v512
    %588 = vmatprep.subr.bf16.mxu0 %v511
    %589 = vmatpush2.bf16.msra.mxu0 %v510
    %590 = vmatprep.mubr.bf16.mxu0 %v353
    %591 = vmatmul.mubr.bf16.gmra.mxu0 %v352
    %v592 = vpop.f32.mrf.mxu0
    %v593 = vadd.f32 %v391, %v592
    %v594 = vpop.f32.mrf.mxu0
    %v595 = vadd.f32 %v395, %v594
    %v596 = vpop.f32.mrf.mxu0
    %v597 = vpop.f32.mrf.mxu0
    %598 = vdwg.mxu0
    %v599 = vmax.f32 %v593, 0.0
    %v600 = vmax.f32 %v595, 0.0
    %v601 = vrot.slane %v599, 4
    %v602 = vadd.f32 %v599, %v601
    %v603 = vrot.slane %v602, 2
    %v604 = vadd.f32 %v602, %v603
    %v605 = vrot.slane %v604, 1
    %v606 = vadd.f32 %v604, %v605
    %v607 = vrot.slane %v600, 4
    %v608 = vadd.f32 %v600, %v607
    %v609 = vrot.slane %v608, 2
    %v610 = vadd.f32 %v608, %v609
    %v611 = vrot.slane %v610, 1
    %v612 = vadd.f32 %v610, %v611
    %v613 = vmul.f32 %v606, 0.125
    %v614 = vmul.f32 %v612, 0.125
    %v615 = vmul.f32 %v599, %v599
    %v616 = vmul.f32 %v600, %v600
    %v617 = vrot.slane %v615, 4
    %v618 = vadd.f32 %v615, %v617
    %v619 = vrot.slane %v618, 2
    %v620 = vadd.f32 %v618, %v619
    %v621 = vrot.slane %v620, 1
    %v622 = vadd.f32 %v620, %v621
    %v623 = vrot.slane %v616, 4
    %v624 = vadd.f32 %v616, %v623
    %v625 = vrot.slane %v624, 2
    %v626 = vadd.f32 %v624, %v625
    %v627 = vrot.slane %v626, 1
    %v628 = vadd.f32 %v626, %v627
    %v629 = vmul.f32 %v622, 0.125
    %v630 = vmul.f32 %v628, 0.125
    %v631 = vmul.f32 %v613, %v613
    %v632 = vmul.f32 %v614, %v614
    %v633 = vsub.f32 %v629, %v631
    %v634 = vsub.f32 %v630, %v632
    %v635 = vmax.f32 %v633, 0.0
    %v636 = vmax.f32 %v634, 0.0
    %v637 = vld [vmem:[%s7] sm:$0x3]
    %v638 = vadd.f32 %v635, 1e-05
    %v639 = vadd.f32 %v636, 1e-05
    %v640 = vrsqrt.pop %v638
    %v641 = vrsqrt.pop %v639
    %v644 = vcombine.low %v640, %v641
    %v646 = vunpack.c.l.s4 1966171168
    %v647 = vunpack.c.0.s8 %v646
    %v648 = vlaneseq
    %v649 = vshrl.u32 %v648, 7
    %v650 = vsub.s32 %v647, %v649
    %v651 = vrot.slane %v644, %v650
    %v653 = vunpack.c.l.s4 1966171168
    %v654 = vunpack.c.0.s8 %v653
    %v655 = vlaneseq
    %v656 = vshrl.u32 %v655, 7
    %v657 = vsub.s32 %v654, %v656
    %v658 = vrot.slane %v651, %v657
    %v660 = vmul.f32 %v637, %v658
    %v661 = vld [vmem:[%s8] sm:$0x3]
    %v664 = vcombine.low %v613, %v614
    %v666 = vunpack.c.l.s4 1966171168
    %v667 = vunpack.c.0.s8 %v666
    %v668 = vlaneseq
    %v669 = vshrl.u32 %v668, 7
    %v670 = vsub.s32 %v667, %v669
    %v671 = vrot.slane %v664, %v670
    %v673 = vunpack.c.l.s4 1966171168
    %v674 = vunpack.c.0.s8 %v673
    %v675 = vlaneseq
    %v676 = vshrl.u32 %v675, 7
    %v677 = vsub.s32 %v674, %v676
    %v678 = vrot.slane %v671, %v677
    %v680 = vmul.f32 %v660, %v678
    %v681 = vsub.f32 %v661, %v680
    %v683 = vlaneseq
    %v684 = vshrl.u32 %v683, 7
    %v685 = vsub.s32 0, %v684
    %v686 = vrot.slane %v660, %v685
    %v687 = vlaneseq
    %v688 = vshrl.u32 %v687, 7
    %v689 = vsub.s32 1, %v688
    %v690 = vrot.slane %v660, %v689
    %v693 = vmul.f32 %v599, %v686
    %v694 = vmul.f32 %v600, %v690
    %v696 = vlaneseq
    %v697 = vshrl.u32 %v696, 7
    %v698 = vsub.s32 0, %v697
    %v699 = vrot.slane %v681, %v698
    %v700 = vlaneseq
    %v701 = vshrl.u32 %v700, 7
    %v702 = vsub.s32 1, %v701
    %v703 = vrot.slane %v681, %v702
    %v706 = vadd.f32 %v693, %v699
    %v707 = vadd.f32 %v694, %v703
    %v708 = vpack.c.bf16 %v706, %v706
    %v709 = vpack.c.bf16 %v707, %v707
    %v710 = vld [vmem:[#allocation8] sm:$0xf]
    %v711 = vld [vmem:[#allocation8 + $0x4] sm:$0xf]
    %v712 = vld [vmem:[#allocation8 + $0x8] sm:$0xf]
    %v713 = vld [vmem:[#allocation8 + $0xc] sm:$0xf]
    %v714 = vld [vmem:[#allocation8 + $0x10] sm:$0xf]
    %v715 = vld [vmem:[#allocation8 + $0x14] sm:$0xf]
    %v716 = vld [vmem:[#allocation8 + $0x18] sm:$0xf]
    %v717 = vld [vmem:[#allocation8 + $0x1c] sm:$0xf]
    %v718 = vld [vmem:[#allocation8 + $0x20] sm:$0xf]
    %v719 = vld [vmem:[#allocation8 + $0x24] sm:$0xf]
    %v720 = vld [vmem:[#allocation8 + $0x28] sm:$0xf]
    %v721 = vld [vmem:[#allocation8 + $0x2c] sm:$0xf]
    %v722 = vld [vmem:[#allocation8 + $0x30] sm:$0xf]
    %v723 = vld [vmem:[#allocation8 + $0x34] sm:$0xf]
    %v724 = vld [vmem:[#allocation8 + $0x38] sm:$0xf]
    %v725 = vld [vmem:[#allocation8 + $0x3c] sm:$0xf]
    %v726 = vld [vmem:[#allocation8 + $0x40] sm:$0xf]
    %v727 = vld [vmem:[#allocation8 + $0x44] sm:$0xf]
    %v728 = vld [vmem:[#allocation8 + $0x48] sm:$0xf]
    %v729 = vld [vmem:[#allocation8 + $0x4c] sm:$0xf]
    %v730 = vld [vmem:[#allocation8 + $0x50] sm:$0xf]
    %v731 = vld [vmem:[#allocation8 + $0x54] sm:$0xf]
    %v732 = vld [vmem:[#allocation8 + $0x58] sm:$0xf]
    %v733 = vld [vmem:[#allocation8 + $0x5c] sm:$0xf]
    %v734 = vld [vmem:[#allocation8 + $0x60] sm:$0xf]
    %v735 = vld [vmem:[#allocation8 + $0x64] sm:$0xf]
    %v736 = vld [vmem:[#allocation8 + $0x68] sm:$0xf]
    %v737 = vld [vmem:[#allocation8 + $0x6c] sm:$0xf]
    %v738 = vld [vmem:[#allocation8 + $0x70] sm:$0xf]
    %v739 = vld [vmem:[#allocation8 + $0x74] sm:$0xf]
    %v740 = vld [vmem:[#allocation8 + $0x78] sm:$0xf]
    %v741 = vld [vmem:[#allocation8 + $0x7c] sm:$0xf]
    %v742 = vld [vmem:[%s10] sm:$0x1]
    %v744 = vlaneseq
    %v745 = vshrl.u32 %v744, 7
    %v746 = vsub.s32 0, %v745
    %v747 = vrot.slane %v742, %v746
    %v781 = vunpack.c.l.b16 %v710
    %v782 = vunpack.c.l.b16 %v711
    %v783 = vunpack.c.l.b16 %v712
    %v784 = vunpack.c.l.b16 %v713
    %v785 = vunpack.c.l.b16 %v714
    %v786 = vunpack.c.l.b16 %v715
    %v787 = vunpack.c.l.b16 %v716
    %v788 = vunpack.c.l.b16 %v717
    %v789 = vunpack.c.l.b16 %v718
    %v790 = vunpack.c.l.b16 %v719
    %v791 = vunpack.c.l.b16 %v720
    %v792 = vunpack.c.l.b16 %v721
    %v793 = vunpack.c.l.b16 %v722
    %v794 = vunpack.c.l.b16 %v723
    %v795 = vunpack.c.l.b16 %v724
    %v796 = vunpack.c.l.b16 %v725
    %v797 = vunpack.c.l.b16 %v726
    %v798 = vunpack.c.l.b16 %v727
    %v799 = vunpack.c.l.b16 %v728
    %v800 = vunpack.c.l.b16 %v729
    %v801 = vunpack.c.l.b16 %v730
    %v802 = vunpack.c.l.b16 %v731
    %v803 = vunpack.c.l.b16 %v732
    %v804 = vunpack.c.l.b16 %v733
    %v805 = vunpack.c.l.b16 %v734
    %v806 = vunpack.c.l.b16 %v735
    %v807 = vunpack.c.l.b16 %v736
    %v808 = vunpack.c.l.b16 %v737
    %v809 = vunpack.c.l.b16 %v738
    %v810 = vunpack.c.l.b16 %v739
    %v811 = vunpack.c.l.b16 %v740
    %v812 = vunpack.c.l.b16 %v741
    %v813 = vpack.c.b16 %v782, %v781
    %v814 = vpack.c.b16 %v784, %v783
    %v815 = vpack.c.b16 %v786, %v785
    %v816 = vpack.c.b16 %v788, %v787
    %v817 = vpack.c.b16 %v790, %v789
    %v818 = vpack.c.b16 %v792, %v791
    %v819 = vpack.c.b16 %v794, %v793
    %v820 = vpack.c.b16 %v796, %v795
    %v821 = vpack.c.b16 %v798, %v797
    %v822 = vpack.c.b16 %v800, %v799
    %v823 = vpack.c.b16 %v802, %v801
    %v824 = vpack.c.b16 %v804, %v803
    %v825 = vpack.c.b16 %v806, %v805
    %v826 = vpack.c.b16 %v808, %v807
    %v827 = vpack.c.b16 %v810, %v809
    %v828 = vpack.c.b16 %v812, %v811
    %845 = vmatprep.subr.bf16.mxu0 0
    %846 = vmatpush1.bf16.msra.mxu0 %v820
    %847 = vmatprep.subr.bf16.mxu0 0
    %848 = vmatpush1.bf16.msra.mxu0 %v819
    %849 = vmatprep.subr.bf16.mxu0 0
    %850 = vmatpush1.bf16.msra.mxu0 %v818
    %851 = vmatprep.subr.bf16.mxu0 0
    %852 = vmatpush1.bf16.msra.mxu0 %v817
    %853 = vmatprep.subr.bf16.mxu0 0
    %854 = vmatpush1.bf16.msra.mxu0 %v816
    %855 = vmatprep.subr.bf16.mxu0 0
    %856 = vmatpush1.bf16.msra.mxu0 %v815
    %857 = vmatprep.subr.bf16.mxu0 0
    %858 = vmatpush1.bf16.msra.mxu0 %v814
    %859 = vmatprep.subr.bf16.mxu0 0
    %860 = vmatpush1.bf16.msra.mxu0 %v813
    %861 = vmatprep.subr.bf16.mxu0 0
    %862 = vmatpush2.bf16.msra.mxu0 %v828
    %863 = vmatprep.subr.bf16.mxu0 0
    %864 = vmatpush2.bf16.msra.mxu0 %v827
    %865 = vmatprep.subr.bf16.mxu0 0
    %866 = vmatpush2.bf16.msra.mxu0 %v826
    %867 = vmatprep.subr.bf16.mxu0 0
    %868 = vmatpush2.bf16.msra.mxu0 %v825
    %869 = vmatprep.subr.bf16.mxu0 0
    %870 = vmatpush2.bf16.msra.mxu0 %v824
    %871 = vmatprep.subr.bf16.mxu0 0
    %872 = vmatpush2.bf16.msra.mxu0 %v823
    %873 = vmatprep.subr.bf16.mxu0 0
    %874 = vmatpush2.bf16.msra.mxu0 %v822
    %875 = vmatprep.subr.bf16.mxu0 0
    %876 = vmatpush2.bf16.msra.mxu0 %v821
    %877 = vmatprep.mubr.bf16.mxu0 %v709
    %878 = vmatmul.mubr.bf16.gmra.mxu0 %v708
    %v879 = vpop.f32.mrf.mxu0
    %v880 = vadd.f32 %v747, %v879
    %v881 = vpop.f32.mrf.mxu0
    %v882 = vpop.f32.mrf.mxu0
    %v883 = vpop.f32.mrf.mxu0
    %884 = vdwg.mxu0
    %885 = vst [vmem:[#allocation10] sm:$0xff] %v880
    // Predicated region
    $region62: #{tpu_custom_call.1} parent=1 // pred_check
      _
    $region63: #{tpu_custom_call.1} parent=1 // pred_check_branch
      %887 = sbr.rel (0) target = $region65
    $region64: #{tpu_custom_call.1} parent=1 // pred_region
      %s889 = ssub.s32 128, 128
      %890 = vsyncadd [#allocation4], %s889
      %s892 = sshll.u32 [#allocation10], 4
      %s893 = int_to_ptr.vmem [resolvable:$true] %s892
      %895 = dma.vmem_to_hbm [thread:$0]  %s893, 128, %s11, [#allocation4]
    $region65: #{tpu_custom_call.1} parent=1 // pred_fallthru
      _
    // Predicated region
    $region66: #{tpu_custom_call.1} parent=1 // pred_check
      _
    $region67: #{tpu_custom_call.1} parent=1 // pred_check_branch
      %897 = sbr.rel (0) target = $region69
    $region68: #{tpu_custom_call.1} parent=1 // pred_region
      %898 = dma.done [#allocation4], 128
    $region69: #{tpu_custom_call.1} parent=1 // pred_fallthru
      _
    %899 = vsyncpa [#allocation3], 1
    %900 = vsyncpa [#allocation6], 1
    %901 = vsyncpa [#allocation9], 1
    %902 = vsyncpa [#allocation4], 1

</llo_original>
